<compile_context>
chip_gen: v6e
topology: v6e:2x2x1
jax: 0.10.0
libtpu: 0.0.40
codegen_flags: <defaults>
</compile_context>

<pallas_src>
import functools

import jax
import jax.numpy as jnp
from jax.experimental import pallas as pl
from jax.experimental.pallas import tpu as pltpu

INPUT_SIZE = 4
HIDDEN_SIZE = 30
OUTPUT_SIZE = 1

_LANE_CHUNK = 512  # lanes processed per inner step; keeps the (30, chunk)
                   # intermediate comfortably inside the 64-vreg register file


def _round_up(x, m):
    return ((x + m - 1) // m) * m


def mlp_kernel(x_ref, w1_ref, b1_ref, w2_ref, b2_ref, o_ref):
    """Fused feature-major MLP tile.

    x_ref:  (INPUT_SIZE,  TB)          f32, batch on the lane axis (streamed)
    w1_ref: (HIDDEN_SIZE, INPUT_SIZE)  f32  == linear1.weight (resident)
    b1_ref: (HIDDEN_SIZE, 1)           f32
    w2_ref: (HIDDEN_SIZE, 1)           f32  == linear2.weight as a column
    b2_ref: (1, 1)                     f32
    o_ref:  (OUTPUT_SIZE, TB)          f32, lane-dense output
    """
    tb = x_ref.shape[1]

    # Hoisted once per grid step: tiny weight columns / biases.
    w1_cols = [w1_ref[:, k:k + 1] for k in range(INPUT_SIZE)]   # each (HID, 1)
    b1 = b1_ref[...]                                            # (HID, 1)
    w2 = w2_ref[...]                                            # (HID, 1)
    b2 = b2_ref[...]                                            # (1, 1)

    # Static inner chunking over the lane axis (no spills for large TB).
    for off in range(0, tb, _LANE_CHUNK):
        cw = min(_LANE_CHUNK, tb - off)
        x = x_ref[:, off:off + cw]                              # (IN, cw)

        # linear1 as K=4 broadcast-FMAs on the VPU
        # (the MXU contraction would be >96% zero padding for K=4).
        h = w1_cols[0] * x[0:1, :]
        for k in range(1, INPUT_SIZE):
            h = h + w1_cols[k] * x[k:k + 1, :]                  # (HID, cw)
        h = jnp.maximum(h + b1, 0.0)                            # bias + ReLU

        # linear2 (N=1) as a weighted sublane reduction (VPU mul + XLU reduce).
        y = jnp.sum(h * w2, axis=0, keepdims=True) + b2         # (1, cw)
        o_ref[:, off:off + cw] = y


@functools.partial(jax.jit, static_argnames=("tile_b",))
def linear_regression_forward(x, w1, b1, w2, b2, *, tile_b=8192):
    """Forward pass matching the PyTorch module.

    x:  (B, 4) f32
    w1: (30, 4) f32  == linear1.weight      b1: (30,)  == linear1.bias
    w2: (1, 30) f32  == linear2.weight      b2: (1,)   == linear2.bias
    returns (B, 1) f32
    """
    B = x.shape[0]

    # Feature-major layout so the batch maps onto the 128-lane axis in-kernel.
    x_fm = x.T                                                  # (4, B)

    # Batch tile: multiple of 128 lanes, capped at tile_b.
    tb = min(tile_b, _round_up(max(B, 1), 128))
    tb = _round_up(tb, 128)
    b_pad = _round_up(B, tb)
    if b_pad != B:
        x_fm = jnp.pad(x_fm, ((0, 0), (0, b_pad - B)))

    grid = (b_pad // tb,)

    out_fm = pl.pallas_call(
        mlp_kernel,
        out_shape=jax.ShapeDtypeStruct((OUTPUT_SIZE, b_pad), jnp.float32),
        grid=grid,
        in_specs=[
            # x: streamed batch tiles (lane-dense).
            pl.BlockSpec((INPUT_SIZE, tb), lambda i: (0, i)),
            # weights / biases: constant index_map -> VMEM-resident across grid.
            pl.BlockSpec((HIDDEN_SIZE, INPUT_SIZE), lambda i: (0, 0)),
            pl.BlockSpec((HIDDEN_SIZE, 1), lambda i: (0, 0)),
            pl.BlockSpec((HIDDEN_SIZE, 1), lambda i: (0, 0)),
            pl.BlockSpec((1, 1), lambda i: (0, 0)),
        ],
        out_specs=pl.BlockSpec((OUTPUT_SIZE, tb), lambda i: (0, i)),
        compiler_params=pltpu.CompilerParams(
            # Independent batch tiles: shard across v7x's 2 TCs; neutral on
            # single-TC v5e/v6e. Per-tile VMEM use is tiny, so the default
            # scoped VMEM limit is plenty on all chips.
            dimension_semantics=("parallel",),
        ),
    )(
        x_fm,
        w1,
        b1.reshape(HIDDEN_SIZE, 1),
        w2.reshape(HIDDEN_SIZE, 1),   # (1,30) -> (30,1) column, contiguous
        b2.reshape(1, 1),
    )

    # (1, B_pad) -> (B, 1): metadata-only reshape + slice (XLA).
    return out_fm.reshape(b_pad, OUTPUT_SIZE)[:B]


if __name__ == "__main__":
    key = jax.random.PRNGKey(0)
    kx, k1, k2, k3, k4 = jax.random.split(key, 5)

    batch = 200  # small; deliberately not a multiple of 128 to exercise padding

    # PyTorch nn.Linear layouts: weight (out, in), bias (out,); uniform init bounds.
    bound1 = 1.0 / jnp.sqrt(INPUT_SIZE)
    bound2 = 1.0 / jnp.sqrt(HIDDEN_SIZE)
    w1 = jax.random.uniform(k1, (HIDDEN_SIZE, INPUT_SIZE), jnp.float32, -bound1, bound1)
    b1 = jax.random.uniform(k2, (HIDDEN_SIZE,), jnp.float32, -bound1, bound1)
    w2 = jax.random.uniform(k3, (OUTPUT_SIZE, HIDDEN_SIZE), jnp.float32, -bound2, bound2)
    b2 = jax.random.uniform(k4, (OUTPUT_SIZE,), jnp.float32, -bound2, bound2)

    x = jax.random.normal(kx, (batch, INPUT_SIZE), jnp.float32)

    out = linear_regression_forward(x, w1, b1, w2, b2)
    jax.block_until_ready(out)

    ref = jnp.maximum(x @ w1.T + b1, 0.0) @ w2.T + b2
    assert out.shape == (batch, OUTPUT_SIZE)
    assert jnp.allclose(out, ref, atol=1e-5, rtol=1e-5)

    # Multi-tile path (grid > 1) with a small tile, still small shapes.
    batch2 = 1000
    x2 = jax.random.normal(kx, (batch2, INPUT_SIZE), jnp.float32)
    out2 = linear_regression_forward(x2, w1, b1, w2, b2, tile_b=256)
    jax.block_until_ready(out2)
    ref2 = jnp.maximum(x2 @ w1.T + b1, 0.0) @ w2.T + b2
    assert out2.shape == (batch2, OUTPUT_SIZE)
    assert jnp.allclose(out2, ref2, atol=1e-5, rtol=1e-5)

    print("KERNEL_OK")
</pallas_src>

<mosaic_0001>
module attributes {stable_mosaic.version = 11 : i64} {
  func.func @mlp_kernel(%arg0: i32, %arg1: memref<4x256xf32, #tpu.memory_space<vmem>>, %arg2: memref<30x4xf32, #tpu.memory_space<vmem>>, %arg3: memref<30x1xf32, #tpu.memory_space<vmem>>, %arg4: memref<30x1xf32, #tpu.memory_space<vmem>>, %arg5: memref<1x1xf32, #tpu.memory_space<vmem>>, %arg6: memref<1x256xf32, #tpu.memory_space<vmem>>) attributes {dimension_semantics = [#tpu.dimension_semantics<parallel>], iteration_bounds = array<i64: 1>, scalar_prefetch = 0 : i64, scratch_operands = 0 : i64, tpu.core_type = #tpu.core_type<tc>, window_params = [{transform_indices = @transform_0, window_bounds = array<i64: 4, 256>}, {pipeline_mode = #tpu.pipeline_mode<synchronous>, transform_indices = @transform_1, window_bounds = array<i64: 30, 4>}, {pipeline_mode = #tpu.pipeline_mode<synchronous>, transform_indices = @transform_2, window_bounds = array<i64: 30, 1>}, {pipeline_mode = #tpu.pipeline_mode<synchronous>, transform_indices = @transform_3, window_bounds = array<i64: 30, 1>}, {pipeline_mode = #tpu.pipeline_mode<synchronous>, transform_indices = @transform_4, window_bounds = array<i64: 1, 1>}, {transform_indices = @transform_5, window_bounds = array<i64: 1, 256>}]} {
    %c0 = arith.constant 0 : index
    %c0_0 = arith.constant 0 : index
    %0 = vector.load %arg2[%c0, %c0_0] : memref<30x4xf32, #tpu.memory_space<vmem>>, vector<30x1xf32>
    %c0_1 = arith.constant 0 : index
    %c1 = arith.constant 1 : index
    %1 = vector.load %arg2[%c0_1, %c1] : memref<30x4xf32, #tpu.memory_space<vmem>>, vector<30x1xf32>
    %c0_2 = arith.constant 0 : index
    %c2 = arith.constant 2 : index
    %2 = vector.load %arg2[%c0_2, %c2] : memref<30x4xf32, #tpu.memory_space<vmem>>, vector<30x1xf32>
    %c0_3 = arith.constant 0 : index
    %c3 = arith.constant 3 : index
    %3 = vector.load %arg2[%c0_3, %c3] : memref<30x4xf32, #tpu.memory_space<vmem>>, vector<30x1xf32>
    %c0_4 = arith.constant 0 : index
    %c0_5 = arith.constant 0 : index
    %4 = vector.load %arg3[%c0_4, %c0_5] : memref<30x1xf32, #tpu.memory_space<vmem>>, vector<30x1xf32>
    %c0_6 = arith.constant 0 : index
    %c0_7 = arith.constant 0 : index
    %5 = vector.load %arg4[%c0_6, %c0_7] : memref<30x1xf32, #tpu.memory_space<vmem>>, vector<30x1xf32>
    %c0_8 = arith.constant 0 : index
    %c0_9 = arith.constant 0 : index
    %6 = vector.load %arg5[%c0_8, %c0_9] : memref<1x1xf32, #tpu.memory_space<vmem>>, vector<1x1xf32>
    %c0_10 = arith.constant 0 : index
    %c0_11 = arith.constant 0 : index
    %7 = vector.load %arg1[%c0_10, %c0_11] : memref<4x256xf32, #tpu.memory_space<vmem>>, vector<4x256xf32>
    %8 = vector.extract_strided_slice %7 {offsets = [0, 0], sizes = [1, 256], strides = [1, 1]} : vector<4x256xf32> to vector<1x256xf32>
    %9 = vector.broadcast %0 : vector<30x1xf32> to vector<30x256xf32>
    %10 = vector.broadcast %8 : vector<1x256xf32> to vector<30x256xf32>
    %11 = arith.mulf %9, %10 : vector<30x256xf32>
    %12 = vector.extract_strided_slice %7 {offsets = [1, 0], sizes = [1, 256], strides = [1, 1]} : vector<4x256xf32> to vector<1x256xf32>
    %13 = vector.broadcast %1 : vector<30x1xf32> to vector<30x256xf32>
    %14 = vector.broadcast %12 : vector<1x256xf32> to vector<30x256xf32>
    %15 = arith.mulf %13, %14 : vector<30x256xf32>
    %16 = arith.addf %11, %15 : vector<30x256xf32>
    %17 = vector.extract_strided_slice %7 {offsets = [2, 0], sizes = [1, 256], strides = [1, 1]} : vector<4x256xf32> to vector<1x256xf32>
    %18 = vector.broadcast %2 : vector<30x1xf32> to vector<30x256xf32>
    %19 = vector.broadcast %17 : vector<1x256xf32> to vector<30x256xf32>
    %20 = arith.mulf %18, %19 : vector<30x256xf32>
    %21 = arith.addf %16, %20 : vector<30x256xf32>
    %22 = vector.extract_strided_slice %7 {offsets = [3, 0], sizes = [1, 256], strides = [1, 1]} : vector<4x256xf32> to vector<1x256xf32>
    %23 = vector.broadcast %3 : vector<30x1xf32> to vector<30x256xf32>
    %24 = vector.broadcast %22 : vector<1x256xf32> to vector<30x256xf32>
    %25 = arith.mulf %23, %24 : vector<30x256xf32>
    %26 = arith.addf %21, %25 : vector<30x256xf32>
    %27 = vector.broadcast %4 : vector<30x1xf32> to vector<30x256xf32>
    %28 = arith.addf %26, %27 : vector<30x256xf32>
    %cst = arith.constant 0.000000e+00 : f32
    %29 = vector.broadcast %cst : f32 to vector<30x256xf32>
    %30 = arith.maximumf %28, %29 : vector<30x256xf32>
    %31 = vector.broadcast %5 : vector<30x1xf32> to vector<30x256xf32>
    %32 = arith.mulf %30, %31 : vector<30x256xf32>
    %cst_12 = arith.constant dense<0.000000e+00> : vector<256xf32>
    %33 = vector.multi_reduction <add>, %32, %cst_12 [0] : vector<30x256xf32> to vector<256xf32>
    %34 = vector.shape_cast %33 : vector<256xf32> to vector<1x256xf32>
    %35 = vector.broadcast %6 : vector<1x1xf32> to vector<1x256xf32>
    %36 = arith.addf %34, %35 : vector<1x256xf32>
    %c0_13 = arith.constant 0 : index
    %c0_14 = arith.constant 0 : index
    %37 = vector.load %arg6[%c0_13, %c0_14] : memref<1x256xf32, #tpu.memory_space<vmem>>, vector<1x256xf32>
    tpu.vector_store %arg6[%c0_13, %c0_14], %36 {strides = array<i32>} : memref<1x256xf32, #tpu.memory_space<vmem>>, vector<1x256xf32>,
    return
  }
  func.func @transform_0(%arg0: i32) -> (i32, i32) {
    %c0_i32 = arith.constant 0 : i32
    %c0_i32_0 = arith.constant 0 : i32
    return %c0_i32, %arg0 : i32, i32
  }
  func.func @transform_1(%arg0: i32) -> (i32, i32) {
    %c0_i32 = arith.constant 0 : i32
    %c0_i32_0 = arith.constant 0 : i32
    %c0_i32_1 = arith.constant 0 : i32
    return %c0_i32, %c0_i32_0 : i32, i32
  }
  func.func @transform_2(%arg0: i32) -> (i32, i32) {
    %c0_i32 = arith.constant 0 : i32
    %c0_i32_0 = arith.constant 0 : i32
    %c0_i32_1 = arith.constant 0 : i32
    return %c0_i32, %c0_i32_0 : i32, i32
  }
  func.func @transform_3(%arg0: i32) -> (i32, i32) {
    %c0_i32 = arith.constant 0 : i32
    %c0_i32_0 = arith.constant 0 : i32
    %c0_i32_1 = arith.constant 0 : i32
    return %c0_i32, %c0_i32_0 : i32, i32
  }
  func.func @transform_4(%arg0: i32) -> (i32, i32) {
    %c0_i32 = arith.constant 0 : i32
    %c0_i32_0 = arith.constant 0 : i32
    %c0_i32_1 = arith.constant 0 : i32
    return %c0_i32, %c0_i32_0 : i32, i32
  }
  func.func @transform_5(%arg0: i32) -> (i32, i32) {
    %c0_i32 = arith.constant 0 : i32
    %c0_i32_0 = arith.constant 0 : i32
    return %c0_i32, %arg0 : i32, i32
  }
}

</mosaic_0001>

<llo_original>
// kernel: linear_regression_forward.1
$region0: #{linear_regression_forward.1}
  #allocation0 [shape = 'u32[]', space=smem, size = 0x4, offset = 0x4, fixed_abs, tag = 'smem constant byte address 0x4 - core index']
  #allocation1 [shape = 'u32[144,128]{1,0:T(1,128)}', space=vmem, size = 0x12000, scoped, tag = 'internal scratch']
  #allocation2 [shape = 'f32[1,1]{1,0:T(1,128)S(1)}', space=vmem, size = 0x200, scoped, tag = 'scoped memory for linear_regression_forward.1']
  %s0 = inlined_call_operand.vmem [shape: f32[4,256], index: 0, kind: input, shape index: {}]
  %s1 = inlined_call_operand.vmem [shape: f32[30,4], index: 1, kind: input, shape index: {}]
  %s2 = inlined_call_operand.vmem [shape: f32[30,1], index: 2, kind: input, shape index: {}]
  %s3 = inlined_call_operand.vmem [shape: f32[30,1], index: 3, kind: input, shape index: {}]
  %s4 = inlined_call_operand.<no memory space> [shape: f32[1,1], index: 4, kind: input, shape index: {}]
  %s5 = inlined_call_operand.vmem [shape: f32[1,256], index: 5, kind: output, shape index: {}]
  %s6 = sld [smem:[#allocation0]]
  $region30: #{linear_regression_forward.1} parent=0
    _
  %s8 = ssub.s32 1, %s6
  %s9 = scalar_select 0, %s8, %s6
  %v10 = vstv %s4
  %11 = vst [vmem:[#allocation2] sm:$0x1] %v10
  // Predicated region
  $region2: #{linear_regression_forward.1} parent=0 // pred_check
    _
  $region3: #{linear_regression_forward.1} parent=0 // pred_check_branch
    %13 = sbr.rel (0) target = $region5
  $region4: #{linear_regression_forward.1} parent=0 // pred_region
    _
  $region5: #{linear_regression_forward.1} parent=0 // pred_fallthru
    _
  // Predicated region
  $region6: #{linear_regression_forward.1} parent=0 // pred_check
    _
  $region7: #{linear_regression_forward.1} parent=0 // pred_check_branch
    %15 = sbr.rel (0) target = $region9
  $region8: #{linear_regression_forward.1} parent=0 // pred_region
    _
  $region9: #{linear_regression_forward.1} parent=0 // pred_fallthru
    _
  // Predicated region
  $region10: #{linear_regression_forward.1} parent=0 // pred_check
    _
  $region11: #{linear_regression_forward.1} parent=0 // pred_check_branch
    %17 = sbr.rel (0) target = $region13
  $region12: #{linear_regression_forward.1} parent=0 // pred_region
    _
  $region13: #{linear_regression_forward.1} parent=0 // pred_fallthru
    _
  // Predicated region
  $region14: #{linear_regression_forward.1} parent=0 // pred_check
    _
  $region15: #{linear_regression_forward.1} parent=0 // pred_check_branch
    %19 = sbr.rel (0) target = $region17
  $region16: #{linear_regression_forward.1} parent=0 // pred_region
    _
  $region17: #{linear_regression_forward.1} parent=0 // pred_fallthru
    _
  // Predicated region
  $region18: #{linear_regression_forward.1} parent=0 // pred_check
    _
  $region19: #{linear_regression_forward.1} parent=0 // pred_check_branch
    %21 = sbr.rel (0) target = $region21
  $region20: #{linear_regression_forward.1} parent=0 // pred_region
    _
  $region21: #{linear_regression_forward.1} parent=0 // pred_fallthru
    _
  %v22 = vld [vmem:[%s1] sm:$0xff]
  %v23 = vld [vmem:[%s1 + $0x8] sm:$0xff]
  %v24 = vld [vmem:[%s1 + $0x10] sm:$0xff]
  %v25 = vld [vmem:[%s1 + $0x18] sm:$0x3f]
  %v26 = vld [vmem:[%s2] sm:$0xff]
  %v27 = vld [vmem:[%s2 + $0x8] sm:$0xff]
  %v28 = vld [vmem:[%s2 + $0x10] sm:$0xff]
  %v29 = vld [vmem:[%s2 + $0x18] sm:$0x3f]
  %v30 = vld [vmem:[%s3] sm:$0xff]
  %v31 = vld [vmem:[%s3 + $0x8] sm:$0xff]
  %v32 = vld [vmem:[%s3 + $0x10] sm:$0xff]
  %v33 = vld [vmem:[%s3 + $0x18] sm:$0x3f]
  %v34 = vld [vmem:[#allocation2] sm:$0x1]
  %v35 = vld [vmem:[%s0] sm:$0xff]
  %37 = vset.pattern.permute.xlu0 0
  %38 = vperm.xlu0 %37, %v22
  %v39 = vpop.permute.xlu0 %38
  %42 = vset.pattern.permute.xlu0 0
  %43 = vperm.xlu0 %42, %v23
  %v44 = vpop.permute.xlu0 %43
  %47 = vset.pattern.permute.xlu0 0
  %48 = vperm.xlu0 %47, %v24
  %v49 = vpop.permute.xlu0 %48
  %52 = vset.pattern.permute.xlu0 0
  %53 = vperm.xlu0 %52, %v25
  %v54 = vpop.permute.xlu0 %53
  %v57 = vlaneseq
  %v58 = vshrl.u32 %v57, 7
  %v59 = vsub.s32 0, %v58
  %v60 = vrot.slane %v35, %v59
  %v61 = vlaneseq
  %v62 = vshrl.u32 %v61, 7
  %v63 = vsub.s32 4, %v62
  %v64 = vrot.slane %v35, %v63
  %v67 = vlaneseq
  %v68 = vshrl.u32 %v67, 7
  %v69 = vsub.s32 0, %v68
  %v70 = vrot.slane %v60, %v69
  %v71 = vlaneseq
  %v72 = vshrl.u32 %v71, 7
  %v73 = vsub.s32 0, %v72
  %v74 = vrot.slane %v64, %v73
  %v75 = vmul.f32 %v39, %v70
  %v76 = vmul.f32 %v39, %v74
  %v77 = vmul.f32 %v44, %v70
  %v78 = vmul.f32 %v44, %v74
  %v79 = vmul.f32 %v49, %v70
  %v80 = vmul.f32 %v49, %v74
  %v81 = vmul.f32 %v54, %v70
  %v82 = vmul.f32 %v54, %v74
  %83 = vset.pattern.permute.xlu0 1
  %84 = vperm.xlu0 %83, %v22
  %v85 = vpop.permute.xlu0 %84
  %87 = vset.pattern.permute.xlu0 1
  %88 = vperm.xlu0 %87, %v23
  %v89 = vpop.permute.xlu0 %88
  %91 = vset.pattern.permute.xlu0 1
  %92 = vperm.xlu0 %91, %v24
  %v93 = vpop.permute.xlu0 %92
  %95 = vset.pattern.permute.xlu0 1
  %96 = vperm.xlu0 %95, %v25
  %v97 = vpop.permute.xlu0 %96
  %v99 = vlaneseq
  %v100 = vshrl.u32 %v99, 7
  %v101 = vsub.s32 1, %v100
  %v102 = vrot.slane %v35, %v101
  %v103 = vlaneseq
  %v104 = vshrl.u32 %v103, 7
  %v105 = vsub.s32 5, %v104
  %v106 = vrot.slane %v35, %v105
  %v109 = vlaneseq
  %v110 = vshrl.u32 %v109, 7
  %v111 = vsub.s32 1, %v110
  %v112 = vrot.slane %v102, %v111
  %v113 = vlaneseq
  %v114 = vshrl.u32 %v113, 7
  %v115 = vsub.s32 1, %v114
  %v116 = vrot.slane %v106, %v115
  %v117 = vmul.f32 %v85, %v112
  %v118 = vmul.f32 %v85, %v116
  %v119 = vmul.f32 %v89, %v112
  %v120 = vmul.f32 %v89, %v116
  %v121 = vmul.f32 %v93, %v112
  %v122 = vmul.f32 %v93, %v116
  %v123 = vmul.f32 %v97, %v112
  %v124 = vmul.f32 %v97, %v116
  %v125 = vadd.f32 %v75, %v117
  %v126 = vadd.f32 %v76, %v118
  %v127 = vadd.f32 %v77, %v119
  %v128 = vadd.f32 %v78, %v120
  %v129 = vadd.f32 %v79, %v121
  %v130 = vadd.f32 %v80, %v122
  %v131 = vadd.f32 %v81, %v123
  %v132 = vadd.f32 %v82, %v124
  %133 = vset.pattern.permute.xlu0 2
  %134 = vperm.xlu0 %133, %v22
  %v135 = vpop.permute.xlu0 %134
  %137 = vset.pattern.permute.xlu0 2
  %138 = vperm.xlu0 %137, %v23
  %v139 = vpop.permute.xlu0 %138
  %141 = vset.pattern.permute.xlu0 2
  %142 = vperm.xlu0 %141, %v24
  %v143 = vpop.permute.xlu0 %142
  %145 = vset.pattern.permute.xlu0 2
  %146 = vperm.xlu0 %145, %v25
  %v147 = vpop.permute.xlu0 %146
  %v149 = vlaneseq
  %v150 = vshrl.u32 %v149, 7
  %v151 = vsub.s32 2, %v150
  %v152 = vrot.slane %v35, %v151
  %v153 = vlaneseq
  %v154 = vshrl.u32 %v153, 7
  %v155 = vsub.s32 6, %v154
  %v156 = vrot.slane %v35, %v155
  %v159 = vlaneseq
  %v160 = vshrl.u32 %v159, 7
  %v161 = vsub.s32 2, %v160
  %v162 = vrot.slane %v152, %v161
  %v163 = vlaneseq
  %v164 = vshrl.u32 %v163, 7
  %v165 = vsub.s32 2, %v164
  %v166 = vrot.slane %v156, %v165
  %v167 = vmul.f32 %v135, %v162
  %v168 = vmul.f32 %v135, %v166
  %v169 = vmul.f32 %v139, %v162
  %v170 = vmul.f32 %v139, %v166
  %v171 = vmul.f32 %v143, %v162
  %v172 = vmul.f32 %v143, %v166
  %v173 = vmul.f32 %v147, %v162
  %v174 = vmul.f32 %v147, %v166
  %v175 = vadd.f32 %v125, %v167
  %v176 = vadd.f32 %v126, %v168
  %v177 = vadd.f32 %v127, %v169
  %v178 = vadd.f32 %v128, %v170
  %v179 = vadd.f32 %v129, %v171
  %v180 = vadd.f32 %v130, %v172
  %v181 = vadd.f32 %v131, %v173
  %v182 = vadd.f32 %v132, %v174
  %183 = vset.pattern.permute.xlu0 3
  %184 = vperm.xlu0 %183, %v22
  %v185 = vpop.permute.xlu0 %184
  %187 = vset.pattern.permute.xlu0 3
  %188 = vperm.xlu0 %187, %v23
  %v189 = vpop.permute.xlu0 %188
  %191 = vset.pattern.permute.xlu0 3
  %192 = vperm.xlu0 %191, %v24
  %v193 = vpop.permute.xlu0 %192
  %195 = vset.pattern.permute.xlu0 3
  %196 = vperm.xlu0 %195, %v25
  %v197 = vpop.permute.xlu0 %196
  %v199 = vlaneseq
  %v200 = vshrl.u32 %v199, 7
  %v201 = vsub.s32 3, %v200
  %v202 = vrot.slane %v35, %v201
  %v203 = vlaneseq
  %v204 = vshrl.u32 %v203, 7
  %v205 = vsub.s32 7, %v204
  %v206 = vrot.slane %v35, %v205
  %v209 = vlaneseq
  %v210 = vshrl.u32 %v209, 7
  %v211 = vsub.s32 3, %v210
  %v212 = vrot.slane %v202, %v211
  %v213 = vlaneseq
  %v214 = vshrl.u32 %v213, 7
  %v215 = vsub.s32 3, %v214
  %v216 = vrot.slane %v206, %v215
  %v217 = vmul.f32 %v185, %v212
  %v218 = vmul.f32 %v185, %v216
  %v219 = vmul.f32 %v189, %v212
  %v220 = vmul.f32 %v189, %v216
  %v221 = vmul.f32 %v193, %v212
  %v222 = vmul.f32 %v193, %v216
  %v223 = vmul.f32 %v197, %v212
  %v224 = vmul.f32 %v197, %v216
  %v225 = vadd.f32 %v175, %v217
  %v226 = vadd.f32 %v176, %v218
  %v227 = vadd.f32 %v177, %v219
  %v228 = vadd.f32 %v178, %v220
  %v229 = vadd.f32 %v179, %v221
  %v230 = vadd.f32 %v180, %v222
  %v231 = vadd.f32 %v181, %v223
  %v232 = vadd.f32 %v182, %v224
  %234 = vset.pattern.permute.xlu0 0
  %235 = vperm.xlu0 %234, %v26
  %v236 = vpop.permute.xlu0 %235
  %239 = vset.pattern.permute.xlu0 0
  %240 = vperm.xlu0 %239, %v27
  %v241 = vpop.permute.xlu0 %240
  %244 = vset.pattern.permute.xlu0 0
  %245 = vperm.xlu0 %244, %v28
  %v246 = vpop.permute.xlu0 %245
  %249 = vset.pattern.permute.xlu0 0
  %250 = vperm.xlu0 %249, %v29
  %v251 = vpop.permute.xlu0 %250
  %v253 = vadd.f32 %v225, %v236
  %v254 = vadd.f32 %v226, %v236
  %v255 = vadd.f32 %v227, %v241
  %v256 = vadd.f32 %v228, %v241
  %v257 = vadd.f32 %v229, %v246
  %v258 = vadd.f32 %v230, %v246
  %v259 = vadd.f32 %v231, %v251
  %v260 = vadd.f32 %v232, %v251
  %v261 = vmax.f32 %v253, 0.0
  %v262 = vmax.f32 %v254, 0.0
  %v263 = vmax.f32 %v255, 0.0
  %v264 = vmax.f32 %v256, 0.0
  %v265 = vmax.f32 %v257, 0.0
  %v266 = vmax.f32 %v258, 0.0
  %v267 = vmax.f32 %v259, 0.0
  %v268 = vmax.f32 %v260, 0.0
  %270 = vset.pattern.permute.xlu0 0
  %271 = vperm.xlu0 %270, %v30
  %v272 = vpop.permute.xlu0 %271
  %275 = vset.pattern.permute.xlu0 0
  %276 = vperm.xlu0 %275, %v31
  %v277 = vpop.permute.xlu0 %276
  %280 = vset.pattern.permute.xlu0 0
  %281 = vperm.xlu0 %280, %v32
  %v282 = vpop.permute.xlu0 %281
  %285 = vset.pattern.permute.xlu0 0
  %286 = vperm.xlu0 %285, %v33
  %v287 = vpop.permute.xlu0 %286
  %v289 = vmul.f32 %v261, %v272
  %v290 = vmul.f32 %v262, %v272
  %v291 = vmul.f32 %v263, %v277
  %v292 = vmul.f32 %v264, %v277
  %v293 = vmul.f32 %v265, %v282
  %v294 = vmul.f32 %v266, %v282
  %v295 = vmul.f32 %v267, %v287
  %v296 = vmul.f32 %v268, %v287
  %v297 = vadd.f32 %v289, %v291
  %v298 = vadd.f32 %v297, %v293
  %vm299 = vcmask 1045504
  %v300 = vsel %vm299, %v295, 0.0
  %v301 = vadd.f32 %v298, %v300
  %v302 = vrot.slane %v301, 4
  %v303 = vadd.f32 %v301, %v302
  %v304 = vrot.slane %v303, 2
  %v305 = vadd.f32 %v303, %v304
  %v306 = vrot.slane %v305, 1
  %v307 = vadd.f32 %v305, %v306
  %v308 = vadd.f32 %v290, %v292
  %v309 = vadd.f32 %v308, %v294
  %v310 = vsel %vm299, %v296, 0.0
  %v311 = vadd.f32 %v309, %v310
  %v312 = vrot.slane %v311, 4
  %v313 = vadd.f32 %v311, %v312
  %v314 = vrot.slane %v313, 2
  %v315 = vadd.f32 %v313, %v314
  %v316 = vrot.slane %v315, 1
  %v317 = vadd.f32 %v315, %v316
  %319 = vset.pattern.permute.xlu0 0
  %320 = vperm.xlu0 %319, %v34
  %v321 = vpop.permute.xlu0 %320
  %v323 = vlaneseq
  %v324 = vshrl.u32 %v323, 7
  %v325 = vsub.s32 0, %v324
  %v326 = vrot.slane %v321, %v325
  %v327 = vadd.f32 %v307, %v326
  %v328 = vadd.f32 %v317, %v326
  %v331 = vcombine.low %v327, %v328
  %v333 = vunpack.c.l.s4 1966171168
  %v334 = vunpack.c.0.s8 %v333
  %v335 = vlaneseq
  %v336 = vshrl.u32 %v335, 7
  %v337 = vsub.s32 %v334, %v336
  %v338 = vrot.slane %v331, %v337
  %v340 = vunpack.c.l.s4 1966171168
  %v341 = vunpack.c.0.s8 %v340
  %v342 = vlaneseq
  %v343 = vshrl.u32 %v342, 7
  %v344 = vsub.s32 %v341, %v343
  %v345 = vrot.slane %v338, %v344
  %v347 = vlaneseq
  %vm348 = vcmp.ge.s32.totalorder %v347, 0
  %vm349 = vcmp.lt.s32.totalorder %v347, 256
  %vm350 = vmand %vm348, %vm349
  %351 = vst.msk [vmem:[%s5] sm:$0x3] %vm350, %v345
  // Predicated region
  $region22: #{linear_regression_forward.1} parent=0 // pred_check
    _
  $region23: #{linear_regression_forward.1} parent=0 // pred_check_branch
    %353 = sbr.rel (0) target = $region25
  $region24: #{linear_regression_forward.1} parent=0 // pred_region
    _
  $region25: #{linear_regression_forward.1} parent=0 // pred_fallthru
    _
  // Predicated region
  $region26: #{linear_regression_forward.1} parent=0 // pred_check
    _
  $region27: #{linear_regression_forward.1} parent=0 // pred_check_branch
    %355 = sbr.rel (0) target = $region29
  $region28: #{linear_regression_forward.1} parent=0 // pred_region
    _
  $region29: #{linear_regression_forward.1} parent=0 // pred_fallthru
    _

</llo_original>
